<compile_context>
chip_gen: v6e
topology: v6e:2x2x1
jax: 0.10.0
libtpu: 0.0.40
codegen_flags: <defaults>
</compile_context>

<pallas_src>
import math
import jax
import jax.numpy as jnp
from jax import lax
from jax.experimental import pallas as pl
from jax.experimental.pallas import tpu as pltpu


# 40 MiB scoped VMEM: above the 16/32 MiB defaults on v5e/v6e and still leaves
# headroom for double buffers on v7x (64 MiB physical).
_VMEM_LIMIT = 40 * 1024 * 1024


def _round_up(x, m):
    return (x + m - 1) // m * m


def _pick_tile(dim, max_tile):
    """Largest MXU-friendly tile (multiple of 128, else of 8) dividing `dim`."""
    cap = min(dim, max_tile)
    for t in range(cap - cap % 128, 0, -128):
        if dim % t == 0:
            return t
    for t in range(cap - cap % 8, 0, -8):
        if dim % t == 0:
            return t
    return dim


def _pick_qtile(n):
    """Query-row tile for attention (divides N, multiple of 128), else full N."""
    for t in (512, 256, 128):
        if n % t == 0:
            return t
    return n


# ----------------------------- matmul kernels --------------------------------


def _make_matmul_kernel(compute_dtype, has_bias, split_k):
    """Tiled MXU matmul: bf16 operands, f32 accumulation."""
    if split_k:
        def kernel(x_ref, w_ref, *rest):
            if has_bias:
                b_ref, o_ref, acc_ref = rest
            else:
                o_ref, acc_ref = rest

            @pl.when(pl.program_id(2) == 0)
            def _():
                acc_ref[...] = jnp.zeros_like(acc_ref)

            acc_ref[...] += jnp.dot(
                x_ref[...].astype(compute_dtype),
                w_ref[...].astype(compute_dtype),
                preferred_element_type=jnp.float32,
            )

            @pl.when(pl.program_id(2) == pl.num_programs(2) - 1)
            def _():
                acc = acc_ref[...]
                if has_bias:
                    acc = acc + b_ref[...].astype(jnp.float32)
                o_ref[...] = acc.astype(o_ref.dtype)
    else:
        # K fits in one tile: no K grid axis, no scratch accumulator, no
        # pl.when init/finalize, no per-K bias DMA.
        def kernel(x_ref, w_ref, *rest):
            if has_bias:
                b_ref, o_ref = rest
            else:
                (o_ref,) = rest
            acc = jnp.dot(
                x_ref[...].astype(compute_dtype),
                w_ref[...].astype(compute_dtype),
                preferred_element_type=jnp.float32,
            )
            if has_bias:
                acc = acc + b_ref[...].astype(jnp.float32)
            o_ref[...] = acc.astype(o_ref.dtype)

    return kernel


def _pallas_matmul(x, w, bias=None, *, out_dtype=None,
                   compute_dtype=jnp.bfloat16):
    M, K = x.shape
    N = w.shape[1]
    out_dtype = out_dtype if out_dtype is not None else x.dtype

    # Pad the row axis so it tiles cleanly (ViT-style M = B*197 etc.) instead
    # of falling back to one giant block that blows the VMEM budget.
    align = 128 if M >= 1024 else 8
    Mp = _round_up(M, align)
    if Mp != M:
        x = jnp.pad(x, ((0, Mp - M), (0, 0)))

    tm = _pick_tile(Mp, 512)
    tn = _pick_tile(N, 1024)   # 384/576/... allowed -> fills 256-wide MXU
    tk = _pick_tile(K, 1024)
    split_k = tk != K

    has_bias = bias is not None
    kernel = _make_matmul_kernel(compute_dtype, has_bias, split_k)

    if split_k:
        grid = (Mp // tm, N // tn, K // tk)
        x_spec = pl.BlockSpec((tm, tk), lambda i, j, kk: (i, kk))
        w_spec = pl.BlockSpec((tk, tn), lambda i, j, kk: (kk, j))
        b_spec = pl.BlockSpec((1, tn), lambda i, j, kk: (0, j))
        o_spec = pl.BlockSpec((tm, tn), lambda i, j, kk: (i, j))
        scratch = [pltpu.VMEM((tm, tn), jnp.float32)]
        dims = ("parallel", "parallel", "arbitrary")
    else:
        grid = (Mp // tm, N // tn)
        x_spec = pl.BlockSpec((tm, tk), lambda i, j: (i, 0))
        w_spec = pl.BlockSpec((tk, tn), lambda i, j: (0, j))
        b_spec = pl.BlockSpec((1, tn), lambda i, j: (0, j))
        o_spec = pl.BlockSpec((tm, tn), lambda i, j: (i, j))
        scratch = []
        dims = ("parallel", "parallel")

    in_specs = [x_spec, w_spec] + ([b_spec] if has_bias else [])
    args = (x, w) + ((bias.reshape(1, N),) if has_bias else ())

    out = pl.pallas_call(
        kernel,
        out_shape=jax.ShapeDtypeStruct((Mp, N), out_dtype),
        grid=grid,
        in_specs=in_specs,
        out_specs=o_spec,
        scratch_shapes=scratch,
        compiler_params=pltpu.CompilerParams(
            dimension_semantics=dims,
            vmem_limit_bytes=_VMEM_LIMIT,
        ),
    )(*args)
    return out[:M] if Mp != M else out


# --------------------------- attention kernels --------------------------------


def _attn_head_loop(q, k, v, o_ref, heads, dk, out_row0=0):
    """Shared inner loop: per-head scores -> softmax -> PV, streamed to o_ref."""
    for h in range(heads):  # static unroll over the heads of this block
        sl = slice(h * dk, (h + 1) * dk)
        # Contract on the last dims (no explicit transpose -> no XLU copy).
        s = lax.dot_general(q[:, sl], k[:, sl],
                            (((1,), (1,)), ((), ())),
                            preferred_element_type=jnp.float32)   # (tq, Nk)
        s = s - jnp.max(s, axis=-1, keepdims=True)
        p = jnp.exp(s)
        p = p * pl.reciprocal(jnp.sum(p, axis=-1, keepdims=True), approx=True)
        o_h = jnp.dot(p.astype(v.dtype), v[:, sl],
                      preferred_element_type=jnp.float32)         # (tq, dk)
        # Stream each head's result straight to its output lane slice
        # (no outs list, no concatenate copy, short live ranges).
        o_ref[out_row0, :, sl] = o_h.astype(o_ref.dtype)


def _make_attn_group_kernel(heads, dk, inv_div):
    def kernel(q_ref, k_ref, v_ref, o_ref):
        # q_ref: (1, tq, gw)   k_ref/v_ref: (1, N, gw)   o_ref: (1, tq, gw)
        q = q_ref[0]
        q = q * jnp.asarray(inv_div, q.dtype)       # fold 1/sqrt(dk) into q
        _attn_head_loop(q, k_ref[0], v_ref[0], o_ref, heads, dk)
    return kernel


def _make_attn_fused_kernel(heads, dk, dim, inv_div):
    def kernel(qkv_ref, o_ref):
        # Small / non-128-aligned dims fallback.
        # qkv_ref: (1, N, 3*dim)   o_ref: (1, N, dim)
        q = qkv_ref[0, :, 0:dim]
        q = q * jnp.asarray(inv_div, q.dtype)
        k = qkv_ref[0, :, dim:2 * dim]
        v = qkv_ref[0, :, 2 * dim:3 * dim]
        _attn_head_loop(q, k, v, o_ref, heads, dk)
    return kernel


def _pallas_attention(qkv, dim, head, dk, div):
    # qkv: (B, N, 3*dim) -- q|k|v concatenated on the lane axis; head split /
    # merge and q/k/v selection are done entirely via BlockSpec index_maps.
    B, N, _ = qkv.shape
    inv_div = 1.0 / div

    # Head group width: smallest divisor of `head` whose lane width g*dk is a
    # multiple of 128 (lane-dense blocks & stores); else the whole dim.
    gw = dim
    for g in range(1, head + 1):
        if head % g == 0 and (g * dk) % 128 == 0:
            gw = g * dk
            break

    if gw % 128 == 0 and dim % gw == 0:
        G = gw // dk
        n_groups = dim // gw
        tq = _pick_qtile(N)      # query-row tiling caps softmax VMEM and gives
        grid = (B, n_groups, N // tq)   # the 2 v7x TensorCores parallel work.

        q_spec = pl.BlockSpec((1, tq, gw), lambda b, gg, qi: (b, qi, gg))
        k_spec = pl.BlockSpec((1, N, gw),
                              lambda b, gg, qi: (b, 0, n_groups + gg))
        v_spec = pl.BlockSpec((1, N, gw),
                              lambda b, gg, qi: (b, 0, 2 * n_groups + gg))
        o_spec = pl.BlockSpec((1, tq, gw), lambda b, gg, qi: (b, qi, gg))

        return pl.pallas_call(
            _make_attn_group_kernel(G, dk, inv_div),
            out_shape=jax.ShapeDtypeStruct((B, N, dim), qkv.dtype),
            grid=grid,
            in_specs=[q_spec, k_spec, v_spec],
            out_specs=o_spec,
            compiler_params=pltpu.CompilerParams(
                dimension_semantics=("parallel", "parallel", "parallel"),
                vmem_limit_bytes=_VMEM_LIMIT,
            ),
        )(qkv, qkv, qkv)

    # Fallback (dim not 128-aligned, e.g. tiny test dims): full-row blocks.
    return pl.pallas_call(
        _make_attn_fused_kernel(head, dk, dim, inv_div),
        out_shape=jax.ShapeDtypeStruct((B, N, dim), qkv.dtype),
        grid=(B,),
        in_specs=[pl.BlockSpec((1, N, 3 * dim), lambda b: (b, 0, 0))],
        out_specs=pl.BlockSpec((1, N, dim), lambda b: (b, 0, 0)),
        compiler_params=pltpu.CompilerParams(
            dimension_semantics=("parallel",),
            vmem_limit_bytes=_VMEM_LIMIT,
        ),
    )(qkv)


# ----------------------------- module wrapper ---------------------------------


class MHSAPallas:
    """JAX/Pallas equivalent of the PyTorch MHSA module (qkv_bias=False).

    MXU operands are bf16 (weights cast once, activations cast at block load),
    accumulation and softmax math in f32.  Set compute_dtype=jnp.float32 for
    exact-precision parity with an all-f32 reference.
    """

    def __init__(self, dim, head, key, compute_dtype=jnp.bfloat16):
        assert dim % head == 0
        self.dim = dim
        self.head = head
        self.k = dim // head
        self.div = math.sqrt(self.k)
        self.compute_dtype = compute_dtype

        k_qkv, k_proj_w, k_proj_b = jax.random.split(key, 3)
        bound = 1.0 / math.sqrt(dim)
        # Stored as (in, out) so forward is x @ W (+ b).
        self.w_qkv = jax.random.uniform(
            k_qkv, (dim, 3 * dim), jnp.float32, -bound, bound
        )
        self.w_proj = jax.random.uniform(
            k_proj_w, (dim, dim), jnp.float32, -bound, bound
        )
        self.b_proj = jax.random.uniform(
            k_proj_b, (dim,), jnp.float32, -bound, bound
        )

    def __call__(self, x):
        B, N, D = x.shape
        cd = self.compute_dtype
        w_qkv = self.w_qkv.astype(cd)     # cast once, outside the grid loop
        w_proj = self.w_proj.astype(cd)

        # --- qkv projection (tiled Pallas matmul, bf16 MXU, f32 acc) ---
        qkv = _pallas_matmul(x.reshape(B * N, D), w_qkv,
                             out_dtype=cd, compute_dtype=cd)      # (B*N, 3D)
        qkv = qkv.reshape(B, N, 3 * D)                            # free

        # --- attention (no transposes; q/k/v + head split via BlockSpecs) ---
        out = _pallas_attention(qkv, D, self.head, self.k, self.div)  # (B,N,D)

        # --- output projection (tiled Pallas matmul + bias) ---
        out = _pallas_matmul(out.reshape(B * N, D), w_proj, self.b_proj,
                             out_dtype=x.dtype, compute_dtype=cd)
        return out.reshape(B, N, D)


# --------------------------- reference (pure JAX) -----------------------------


def _reference_mhsa(x, mod: MHSAPallas):
    """Pure-JAX reference using the same bf16-operand / f32-accumulate recipe."""
    B, N, D = x.shape
    H, dk = mod.head, mod.k
    cd = mod.compute_dtype
    w_qkv = mod.w_qkv.astype(cd)
    w_proj = mod.w_proj.astype(cd)

    qkv = jnp.dot(x.reshape(B * N, D).astype(cd), w_qkv,
                  preferred_element_type=jnp.float32).astype(cd)
    qkv = qkv.reshape(B, N, 3, H, dk)
    q, k, v = qkv[:, :, 0], qkv[:, :, 1], qkv[:, :, 2]     # (B, N, H, dk)
    q = q * jnp.asarray(1.0 / mod.div, cd)                  # same fold as kernel
    s = jnp.einsum("bnhd,bmhd->bhnm", q, k,
                   preferred_element_type=jnp.float32)
    p = jax.nn.softmax(s, axis=-1)
    o = jnp.einsum("bhnm,bmhd->bnhd", p.astype(cd), v,
                   preferred_element_type=jnp.float32).astype(cd)
    o = o.reshape(B * N, D)
    out = jnp.dot(o, w_proj, preferred_element_type=jnp.float32) + mod.b_proj
    return out.reshape(B, N, D).astype(x.dtype)


if __name__ == "__main__":
    key = jax.random.PRNGKey(0)
    k_x, k_params = jax.random.split(key)

    B, N, D, H = 2, 8, 32, 4  # seq=8, hidden=32, 4 heads (dk=8)
    x = jax.random.normal(k_x, (B, N, D), dtype=jnp.float32)

    mhsa = MHSAPallas(dim=D, head=H, key=k_params)

    out = mhsa(x)
    out = jax.block_until_ready(out)

    ref = _reference_mhsa(x, mhsa)
    assert out.shape == (B, N, D)
    # Tolerance covers the approximate (EUP) softmax reciprocal and tiled-vs-
    # untiled f32 accumulation ordering; the reference uses the same bf16
    # operand casts as the kernels.
    assert jnp.allclose(out, ref, atol=2e-2, rtol=2e-2), float(
        jnp.max(jnp.abs(out - ref))
    )

    print("KERNEL_OK")
</pallas_src>

<mosaic_0001>
module attributes {stable_mosaic.version = 11 : i64} {
  func.func @kernel(%arg0: i32, %arg1: i32, %arg2: memref<16x32xf32, #tpu.memory_space<vmem>>, %arg3: memref<32x96xbf16, #tpu.memory_space<vmem>>, %arg4: memref<16x96xbf16, #tpu.memory_space<vmem>>) attributes {dimension_semantics = [#tpu.dimension_semantics<parallel>, #tpu.dimension_semantics<parallel>], iteration_bounds = array<i64: 1, 1>, scalar_prefetch = 0 : i64, scratch_operands = 0 : i64, tpu.core_type = #tpu.core_type<tc>, window_params = [{transform_indices = @transform_0, window_bounds = array<i64: 16, 32>}, {transform_indices = @transform_1, window_bounds = array<i64: 32, 96>}, {transform_indices = @transform_2, window_bounds = array<i64: 16, 96>}]} {
    %c0 = arith.constant 0 : index
    %c0_0 = arith.constant 0 : index
    %0 = vector.load %arg2[%c0, %c0_0] : memref<16x32xf32, #tpu.memory_space<vmem>>, vector<16x32xf32>
    %1 = arith.truncf %0 : vector<16x32xf32> to vector<16x32xbf16>
    %c0_1 = arith.constant 0 : index
    %c0_2 = arith.constant 0 : index
    %2 = vector.load %arg3[%c0_1, %c0_2] : memref<32x96xbf16, #tpu.memory_space<vmem>>, vector<32x96xbf16>
    %cst = arith.constant dense<0.000000e+00> : vector<16x96xf32>
    %3 = tpu.matmul %1, %2, %cst {dimension_numbers = #tpu.dot_dimension_numbers<[1], [0], [0], [1], [0, 0, 1, 1], [], []>} : vector<16x32xbf16>, vector<32x96xbf16>, vector<16x96xf32> -> vector<16x96xf32>
    %4 = arith.truncf %3 : vector<16x96xf32> to vector<16x96xbf16>
    %c0_3 = arith.constant 0 : index
    %c0_4 = arith.constant 0 : index
    %5 = vector.load %arg4[%c0_3, %c0_4] : memref<16x96xbf16, #tpu.memory_space<vmem>>, vector<16x96xbf16>
    tpu.vector_store %arg4[%c0_3, %c0_4], %4 {strides = array<i32>} : memref<16x96xbf16, #tpu.memory_space<vmem>>, vector<16x96xbf16>,
    return
  }
  func.func @transform_0(%arg0: i32, %arg1: i32) -> (i32, i32) {
    %c0_i32 = arith.constant 0 : i32
    %c0_i32_0 = arith.constant 0 : i32
    return %arg0, %c0_i32 : i32, i32
  }
  func.func @transform_1(%arg0: i32, %arg1: i32) -> (i32, i32) {
    %c0_i32 = arith.constant 0 : i32
    %c0_i32_0 = arith.constant 0 : i32
    return %c0_i32, %arg1 : i32, i32
  }
  func.func @transform_2(%arg0: i32, %arg1: i32) -> (i32, i32) {
    %c0_i32 = arith.constant 0 : i32
    return %arg0, %arg1 : i32, i32
  }
}

</mosaic_0001>

<llo_original>
// kernel: tpu_custom_call.1
$region0: #{tpu_custom_call.1}
  #allocation0 [shape = 'u32[]', space=smem, size = 0x4, offset = 0x4, fixed_abs, tag = 'smem constant byte address 0x4 - core index']
  #allocation1 [shape = 'u32[144,128]{1,0:T(1,128)}', space=vmem, size = 0x12000, scoped, tag = 'internal scratch']
  %s0 = inlined_call_operand.hbm [shape: f32[16,32], index: 0, kind: input, shape index: {}]
  %s1 = inlined_call_operand.hbm [shape: bf16[32,96], index: 1, kind: input, shape index: {}]
  %s2 = inlined_call_operand.hbm [shape: bf16[16,96], index: 2, kind: output, shape index: {}]
  %s3 = sld [smem:[#allocation0]]
  $region26: #{tpu_custom_call.1} parent=0
    _
  %s5 = ssub.s32 1, %s3
  %s6 = scalar_select 0, %s5, %s3
  $region1: #{tpu_custom_call.1} parent=0
    #allocation2 [shape = 'u8[8192]{0}', space=vmem, size = 0x2000, scoped, tag = 'input window, operand 0, single buffered']
    #allocation3 [shape = 's32[1]{0}', space=sflag, size = 0x4, scoped, tag = 'scoped memory for tpu_custom_call.1']
    #allocation4 [shape = 's32[1]{0}', space=sflag, size = 0x4, scoped, tag = 'scoped memory for tpu_custom_call.1']
    #allocation5 [shape = 'u8[8192]{0}', space=vmem, size = 0x2000, scoped, tag = 'input window, operand 1, single buffered']
    #allocation6 [shape = 's32[1]{0}', space=sflag, size = 0x4, scoped, tag = 'scoped memory for tpu_custom_call.1']
    #allocation7 [shape = 'u8[4096]{0}', space=vmem, size = 0x1000, scoped, tag = 'output window, operand 0, single buffered']
    %7 = vsyncpa [#allocation3], 0
    %8 = vsyncpa [#allocation6], 0
    %9 = vsyncpa [#allocation4], 0
    // Predicated region
    $region2: #{tpu_custom_call.1} parent=1 // pred_check
      _
    $region3: #{tpu_custom_call.1} parent=1 // pred_check_branch
      %11 = sbr.rel (0) target = $region5
    $region4: #{tpu_custom_call.1} parent=1 // pred_region
      %s13 = ssub.s32 256, 256
      %14 = vsyncadd [#allocation3], %s13
      %s15 = sshll.u32 [#allocation2], 4
      %s16 = int_to_ptr.vmem [resolvable:$true] %s15
      %21 = dma.hbm_to_vmem [thread:$0]  %s0, 256, %s16, [#allocation3], 128, 128, 8
    $region5: #{tpu_custom_call.1} parent=1 // pred_fallthru
      _
    // Predicated region
    $region6: #{tpu_custom_call.1} parent=1 // pred_check
      _
    $region7: #{tpu_custom_call.1} parent=1 // pred_check_branch
      %23 = sbr.rel (0) target = $region9
    $region8: #{tpu_custom_call.1} parent=1 // pred_region
      %s25 = ssub.s32 256, 256
      %26 = vsyncadd [#allocation6], %s25
      %s27 = sshll.u32 [#allocation5], 4
      %s28 = int_to_ptr.vmem [resolvable:$true] %s27
      %33 = dma.hbm_to_vmem [thread:$0]  %s1, 256, %s28, [#allocation6], 64, 64, 4
    $region9: #{tpu_custom_call.1} parent=1 // pred_fallthru
      _
    // Predicated region
    $region10: #{tpu_custom_call.1} parent=1 // pred_check
      _
    $region11: #{tpu_custom_call.1} parent=1 // pred_check_branch
      %35 = sbr.rel (0) target = $region13
    $region12: #{tpu_custom_call.1} parent=1 // pred_region
      %36 = dma.done [#allocation3], 256
    $region13: #{tpu_custom_call.1} parent=1 // pred_fallthru
      _
    // Predicated region
    $region14: #{tpu_custom_call.1} parent=1 // pred_check
      _
    $region15: #{tpu_custom_call.1} parent=1 // pred_check_branch
      %38 = sbr.rel (0) target = $region17
    $region16: #{tpu_custom_call.1} parent=1 // pred_region
      %39 = dma.done [#allocation6], 256
    $region17: #{tpu_custom_call.1} parent=1 // pred_fallthru
      _
    %v41 = vld [vmem:[#allocation2] sm:$0xff]
    %v42 = vld [vmem:[#allocation2 + $0x8] sm:$0xff]
    %v43 = vpack.c.bf16 %v42, %v41
    %v44 = vld [vmem:[#allocation5] sm:$0xf]
    %v45 = vld [vmem:[#allocation5 + $0x4] sm:$0xf]
    %v46 = vld [vmem:[#allocation5 + $0x8] sm:$0xf]
    %v47 = vld [vmem:[#allocation5 + $0xc] sm:$0xf]
    %v52 = vunpack.c.l.b16 %v44
    %v53 = vunpack.c.l.b16 %v45
    %v54 = vunpack.c.l.b16 %v46
    %v55 = vunpack.c.l.b16 %v47
    %v56 = vpack.c.b16 %v53, %v52
    %v57 = vpack.c.b16 %v55, %v54
    %vm60 = vcmask 261120
    %v62 = vsel %vm60, %v43, 0
    %64 = vmatprep.subr.bf16.mxu0 0
    %65 = vmatpush1.bf16.msra.mxu0 0
    %66 = vmatprep.subr.bf16.mxu0 0
    %67 = vmatpush1.bf16.msra.mxu0 0
    %68 = vmatprep.subr.bf16.mxu0 0
    %69 = vmatpush1.bf16.msra.mxu0 0
    %70 = vmatprep.subr.bf16.mxu0 0
    %71 = vmatpush1.bf16.msra.mxu0 0
    %72 = vmatprep.subr.bf16.mxu0 0
    %73 = vmatpush1.bf16.msra.mxu0 0
    %74 = vmatprep.subr.bf16.mxu0 0
    %75 = vmatpush1.bf16.msra.mxu0 0
    %76 = vmatprep.subr.bf16.mxu0 0
    %77 = vmatpush1.bf16.msra.mxu0 %v57
    %78 = vmatprep.subr.bf16.mxu0 0
    %79 = vmatpush1.bf16.msra.mxu0 %v56
    %80 = vmatprep.subr.bf16.mxu0 0
    %81 = vmatpush2.bf16.msra.mxu0 0
    %82 = vmatprep.subr.bf16.mxu0 0
    %83 = vmatpush2.bf16.msra.mxu0 0
    %84 = vmatprep.subr.bf16.mxu0 0
    %85 = vmatpush2.bf16.msra.mxu0 0
    %86 = vmatprep.subr.bf16.mxu0 0
    %87 = vmatpush2.bf16.msra.mxu0 0
    %88 = vmatprep.subr.bf16.mxu0 0
    %89 = vmatpush2.bf16.msra.mxu0 0
    %90 = vmatprep.subr.bf16.mxu0 0
    %91 = vmatpush2.bf16.msra.mxu0 0
    %92 = vmatprep.subr.bf16.mxu0 0
    %93 = vmatpush2.bf16.msra.mxu0 0
    %94 = vmatprep.subr.bf16.mxu0 0
    %95 = vmatpush2.bf16.msra.mxu0 0
    %96 = vmatprep.mubr.bf16.mxu0 0
    %97 = vmatmul.mubr.bf16.gmra.mxu0 %v62
    %v98 = vpop.f32.mrf.mxu0
    %v99 = vadd.f32 0.0, %v98
    %v100 = vpop.f32.mrf.mxu0
    %v101 = vpop.f32.mrf.mxu0
    %v102 = vadd.f32 0.0, %v101
    %v103 = vpop.f32.mrf.mxu0
    %104 = vdwg.mxu0
    %v105 = vpack.c.bf16 %v102, %v99
    %v107 = vunpack.c.l.b16 %v105
    %v108 = vunpack.c.h.b16 %v105
    %v109 = vpack.c.b16 %v107, %v107
    %v110 = vpack.c.b16 %v108, %v108
    %vm113 = vcmask 781312
    %114 = vst.msk [vmem:[#allocation7] sm:$0xf] %vm113, %v109
    %115 = vst.msk [vmem:[#allocation7 + $0x4] sm:$0xf] %vm113, %v110
    // Predicated region
    $region18: #{tpu_custom_call.1} parent=1 // pred_check
      _
    $region19: #{tpu_custom_call.1} parent=1 // pred_check_branch
      %117 = sbr.rel (0) target = $region21
    $region20: #{tpu_custom_call.1} parent=1 // pred_region
      %s119 = ssub.s32 128, 128
      %120 = vsyncadd [#allocation4], %s119
      %s121 = sshll.u32 [#allocation7], 4
      %s122 = int_to_ptr.vmem [resolvable:$true] %s121
      %127 = dma.vmem_to_hbm [thread:$0]  %s122, 128, %s2, [#allocation4], 64, 64, 4
    $region21: #{tpu_custom_call.1} parent=1 // pred_fallthru
      _
    // Predicated region
    $region22: #{tpu_custom_call.1} parent=1 // pred_check
      _
    $region23: #{tpu_custom_call.1} parent=1 // pred_check_branch
      %129 = sbr.rel (0) target = $region25
    $region24: #{tpu_custom_call.1} parent=1 // pred_region
      %130 = dma.done [#allocation4], 128
    $region25: #{tpu_custom_call.1} parent=1 // pred_fallthru
      _
    %131 = vsyncpa [#allocation3], 1
    %132 = vsyncpa [#allocation6], 1
    %133 = vsyncpa [#allocation4], 1

</llo_original>
